<compile_context>
chip_gen: v7x
topology: tpu7x:2x2x1
jax: 0.10.0
libtpu: 0.0.40
codegen_flags: <defaults>
</compile_context>

<pallas_src>
import functools

import jax
import jax.numpy as jnp
from jax import lax
from jax.experimental import pallas as pl
from jax.experimental.pallas import tpu as pltpu

_LANE = 128
_SUBLANE = 8
_TARGET_BATCH_TILE = 512


def _round_up(n, m):
    return ((n + m - 1) // m) * m


def _batch_tiling(batch):
    """Pick a sublane-aligned batch tile and the padded batch size."""
    tb = min(_TARGET_BATCH_TILE, _round_up(batch, _SUBLANE))
    return tb, _round_up(batch, tb)


# ----------------------------- Pallas kernels -----------------------------

def _fused_fwd_kernel(x_ref, w_ref, b_ref, a_ref,
                      logits_ref, mode_ref, stats_ref, *, n_valid):
    """Linear + mode + entropy + log_probs, all in one pass.

    x_ref:      [TB, D]       w_ref: [D, N_pad]      b_ref: [1, N_pad]
    a_ref:      [TB, N_pad]   (actions, zero-padded columns)
    logits_ref: [TB, N_pad]   mode_ref: [TB, N_pad]
    stats_ref:  [TB, 128]     col 0 = entropy sum, col 1 = log_prob sum
    """
    logits = jnp.dot(x_ref[...], w_ref[...],
                     preferred_element_type=jnp.float32) + b_ref[...]

    sp = jax.nn.softplus(logits)        # softplus(l), shared by entropy & log_prob
    p = jax.nn.sigmoid(logits)

    # Mask out the padded action columns before reducing.
    col = lax.broadcasted_iota(jnp.int32, logits.shape, 1)
    valid = (col < n_valid).astype(jnp.float32)

    # H(l) = softplus(l) - l * sigmoid(l)   (single-softplus stable form)
    ent = (sp - logits * p) * valid
    # Bernoulli(logits=l).log_prob(a) = a*l - softplus(l)
    lp = (a_ref[...] * logits - sp) * valid

    logits_ref[...] = logits
    # mode: (sigmoid(l) > 0.5) == (l > 0)
    mode_ref[...] = (logits > 0.0).astype(jnp.float32)

    ent_sum = jnp.sum(ent, axis=-1, keepdims=True)   # [TB, 1]
    lp_sum = jnp.sum(lp, axis=-1, keepdims=True)     # [TB, 1]

    # Pack the two reductions into a lane-dense [TB, 128] slab (unmasked store).
    lane = lax.broadcasted_iota(jnp.int32, stats_ref.shape, 1)
    stats_ref[...] = jnp.where(lane == 0, ent_sum,
                               jnp.where(lane == 1, lp_sum, 0.0))


def _log_probs_kernel(logits_ref, a_ref, out_ref, *, n_valid):
    """Standalone log_probs (used only when actions were not fused at forward time)."""
    l = logits_ref[...]
    sp = jax.nn.softplus(l)
    col = lax.broadcasted_iota(jnp.int32, l.shape, 1)
    valid = (col < n_valid).astype(jnp.float32)
    lp_sum = jnp.sum((a_ref[...] * l - sp) * valid, axis=-1, keepdims=True)
    lane = lax.broadcasted_iota(jnp.int32, out_ref.shape, 1)
    out_ref[...] = jnp.where(lane == 0, lp_sum, 0.0)


# ------------------------------ JAX wrappers -------------------------------

def _bernoulli_forward(x, w_t, b, actions_pad, n_valid):
    """x: [B, D] f32, w_t: [D, N_pad], b: [1, N_pad], actions_pad: [B, N_pad]."""
    B, D = x.shape
    N_pad = w_t.shape[1]
    TB, B_pad = _batch_tiling(B)
    if B_pad != B:
        x = jnp.pad(x, ((0, B_pad - B), (0, 0)))
        actions_pad = jnp.pad(actions_pad, ((0, B_pad - B), (0, 0)))

    kernel = functools.partial(_fused_fwd_kernel, n_valid=n_valid)
    out_shapes = (
        jax.ShapeDtypeStruct((B_pad, N_pad), jnp.float32),   # logits (padded)
        jax.ShapeDtypeStruct((B_pad, N_pad), jnp.float32),   # mode   (padded)
        jax.ShapeDtypeStruct((B_pad, _LANE), jnp.float32),   # stats: [:,0]=ent, [:,1]=lp
    )
    logits_p, mode_p, stats = pl.pallas_call(
        kernel,
        out_shape=out_shapes,
        grid=(B_pad // TB,),
        in_specs=[
            pl.BlockSpec((TB, D), lambda i: (i, 0)),
            pl.BlockSpec((D, N_pad), lambda i: (0, 0)),
            pl.BlockSpec((1, N_pad), lambda i: (0, 0)),
            pl.BlockSpec((TB, N_pad), lambda i: (i, 0)),
        ],
        out_specs=(
            pl.BlockSpec((TB, N_pad), lambda i: (i, 0)),
            pl.BlockSpec((TB, N_pad), lambda i: (i, 0)),
            pl.BlockSpec((TB, _LANE), lambda i: (i, 0)),
        ),
        compiler_params=pltpu.CompilerParams(
            dimension_semantics=("parallel",)),
    )(x, w_t, b, actions_pad)
    return logits_p, mode_p, stats


def _bernoulli_log_probs(logits_pad, actions, n_valid):
    """logits_pad: [B_pad, N_pad] (kernel-internal layout), actions: [B, N] -> [B, 1]."""
    B, N = actions.shape
    B_pad, N_pad = logits_pad.shape
    TB, _ = _batch_tiling(B)
    a = jnp.pad(actions.astype(jnp.float32),
                ((0, B_pad - B), (0, N_pad - N)))

    kernel = functools.partial(_log_probs_kernel, n_valid=n_valid)
    stats = pl.pallas_call(
        kernel,
        out_shape=jax.ShapeDtypeStruct((B_pad, _LANE), jnp.float32),
        grid=(B_pad // TB,),
        in_specs=[
            pl.BlockSpec((TB, N_pad), lambda i: (i, 0)),
            pl.BlockSpec((TB, N_pad), lambda i: (i, 0)),
        ],
        out_specs=pl.BlockSpec((TB, _LANE), lambda i: (i, 0)),
        compiler_params=pltpu.CompilerParams(
            dimension_semantics=("parallel",)),
    )(logits_pad, a)
    return stats[:B, 0:1]


class FixedBernoulliJax:
    """Result of Bernoulli.forward — mirrors FixedBernoulli's API."""

    def __init__(self, logits_pad, mode_pad, entropy, lp, batch, num_outputs):
        self._logits_pad = logits_pad      # [B_pad, N_pad] kernel-internal layout
        self._mode_pad = mode_pad
        self._entropy = entropy            # [B]
        self._lp = lp                      # [B, 1] or None (fused training path)
        self._B = batch
        self._N = num_outputs

    @property
    def logits(self):
        return self._logits_pad[:self._B, :self._N]

    @property
    def probs(self):
        # Not stored by the kernel (saves 1/3 of HBM writes); recomputed lazily.
        return jax.nn.sigmoid(self.logits)

    def mode(self):
        return self._mode_pad[:self._B, :self._N]

    def entropy(self):
        return self._entropy

    def log_probs(self, actions):
        if self._lp is not None:
            # Fused path: computed inside the forward kernel for these actions.
            return self._lp
        return _bernoulli_log_probs(self._logits_pad, actions, self._N)


class BernoulliPallas:
    """Pallas port of the PyTorch `Bernoulli` module."""

    def __init__(self, num_inputs, num_outputs, use_orthogonal=True,
                 gain=0.01, key=None):
        if key is None:
            key = jax.random.PRNGKey(0)
        if use_orthogonal:
            w = jax.nn.initializers.orthogonal(scale=gain)(
                key, (num_outputs, num_inputs), jnp.float32)
        else:
            w = gain * jax.nn.initializers.glorot_uniform()(
                key, (num_outputs, num_inputs), jnp.float32)

        self.num_inputs = num_inputs
        self.num_outputs = num_outputs
        self.n_pad = max(_LANE, _round_up(num_outputs, _LANE))

        # Pre-transposed + zero-padded to a lane-dense output width.
        w_t = jnp.transpose(w)                                   # [D, N]
        self.w_t = jnp.pad(w_t, ((0, 0), (0, self.n_pad - num_outputs)))
        self.b = jnp.zeros((1, self.n_pad), jnp.float32)

    def __call__(self, x, actions=None):
        """x: [B, num_inputs]. If `actions` is given, log_probs is fused in."""
        x = x.astype(jnp.float32)
        B = x.shape[0]
        if actions is not None:
            a = jnp.pad(actions.astype(jnp.float32),
                        ((0, 0), (0, self.n_pad - self.num_outputs)))
        else:
            a = jnp.zeros((B, self.n_pad), jnp.float32)

        logits_p, mode_p, stats = _bernoulli_forward(
            x, self.w_t, self.b, a, self.num_outputs)

        entropy = stats[:B, 0]                               # [B]
        lp = stats[:B, 1:2] if actions is not None else None  # [B, 1]
        return FixedBernoulliJax(logits_p, mode_p, entropy, lp,
                                 B, self.num_outputs)


# ---------------------------------- main -----------------------------------

if __name__ == "__main__":
    key = jax.random.PRNGKey(0)
    kx, kw, ka = jax.random.split(key, 3)

    B, num_inputs, num_outputs = 8, 32, 8
    x = jax.random.normal(kx, (B, num_inputs), jnp.float32)
    actions = (jax.random.uniform(ka, (B, num_outputs)) > 0.5).astype(jnp.float32)

    module = BernoulliPallas(num_inputs, num_outputs,
                             use_orthogonal=True, gain=0.01, key=kw)

    # Fused training path: one pallas_call computes logits/mode/entropy/log_probs.
    dist = module(x, actions)
    logits = dist.logits
    probs = dist.probs
    mode = dist.mode()
    entropy = dist.entropy()
    log_probs = dist.log_probs(actions)

    # Lazy path (actions not known at forward time) exercises the standalone kernel.
    dist_lazy = module(x)
    log_probs_lazy = dist_lazy.log_probs(actions)

    jax.block_until_ready((logits, probs, mode, entropy, log_probs, log_probs_lazy))

    # Plain-JAX reference of the same math (unpadded weights).
    w_ref = module.w_t[:, :num_outputs]
    b_ref = module.b[:, :num_outputs]
    ref_logits = x @ w_ref + b_ref
    ref_probs = jax.nn.sigmoid(ref_logits)
    ref_ent = jnp.sum(jax.nn.softplus(ref_logits) - ref_logits * ref_probs, axis=-1)
    ref_lp = jnp.sum(actions * ref_logits - jax.nn.softplus(ref_logits),
                     axis=-1, keepdims=True)

    assert jnp.allclose(logits, ref_logits, atol=1e-5)
    assert jnp.allclose(probs, ref_probs, atol=1e-5)
    assert jnp.allclose(mode, (ref_logits > 0.0).astype(jnp.float32))
    assert jnp.allclose(entropy, ref_ent, atol=1e-5)
    assert jnp.allclose(log_probs, ref_lp, atol=1e-5)
    assert jnp.allclose(log_probs_lazy, ref_lp, atol=1e-5)

    assert logits.shape == (B, num_outputs)
    assert mode.shape == (B, num_outputs)
    assert entropy.shape == (B,)
    assert log_probs.shape == (B, 1)

    print("KERNEL_OK")
</pallas_src>

<mosaic_0001>
module attributes {stable_mosaic.version = 11 : i64} {
  func.func @_fused_fwd_kernel(%arg0: i32, %arg1: memref<8x32xf32, #tpu.memory_space<vmem>>, %arg2: memref<32x128xf32, #tpu.memory_space<vmem>>, %arg3: memref<1x128xf32, #tpu.memory_space<vmem>>, %arg4: memref<8x128xf32, #tpu.memory_space<vmem>>, %arg5: memref<8x128xf32, #tpu.memory_space<vmem>>, %arg6: memref<8x128xf32, #tpu.memory_space<vmem>>, %arg7: memref<8x128xf32, #tpu.memory_space<vmem>>) attributes {dimension_semantics = [#tpu.dimension_semantics<parallel>], iteration_bounds = array<i64: 1>, scalar_prefetch = 0 : i64, scratch_operands = 0 : i64, tpu.core_type = #tpu.core_type<tc>, window_params = [{transform_indices = @transform_0, window_bounds = array<i64: 8, 32>}, {pipeline_mode = #tpu.pipeline_mode<synchronous>, transform_indices = @transform_1, window_bounds = array<i64: 32, 128>}, {pipeline_mode = #tpu.pipeline_mode<synchronous>, transform_indices = @transform_2, window_bounds = array<i64: 1, 128>}, {transform_indices = @transform_3, window_bounds = array<i64: 8, 128>}, {transform_indices = @transform_4, window_bounds = array<i64: 8, 128>}, {transform_indices = @transform_5, window_bounds = array<i64: 8, 128>}, {transform_indices = @transform_6, window_bounds = array<i64: 8, 128>}]} {
    %c0 = arith.constant 0 : index
    %c0_0 = arith.constant 0 : index
    %0 = vector.load %arg1[%c0, %c0_0] : memref<8x32xf32, #tpu.memory_space<vmem>>, vector<8x32xf32>
    %c0_1 = arith.constant 0 : index
    %c0_2 = arith.constant 0 : index
    %1 = vector.load %arg2[%c0_1, %c0_2] : memref<32x128xf32, #tpu.memory_space<vmem>>, vector<32x128xf32>
    %cst = arith.constant dense<0.000000e+00> : vector<8x128xf32>
    %2 = tpu.matmul %0, %1, %cst {dimension_numbers = #tpu.dot_dimension_numbers<[1], [0], [0], [1], [0, 0, 1, 1], [], []>} : vector<8x32xf32>, vector<32x128xf32>, vector<8x128xf32> -> vector<8x128xf32>
    %c0_3 = arith.constant 0 : index
    %c0_4 = arith.constant 0 : index
    %3 = vector.load %arg3[%c0_3, %c0_4] : memref<1x128xf32, #tpu.memory_space<vmem>>, vector<1x128xf32>
    %4 = vector.broadcast %3 : vector<1x128xf32> to vector<8x128xf32>
    %5 = arith.addf %2, %4 : vector<8x128xf32>
    %cst_5 = arith.constant 0.000000e+00 : f32
    %6 = vector.broadcast %cst_5 : f32 to vector<8x128xf32>
    %7 = arith.maximumf %5, %6 : vector<8x128xf32>
    %8 = vector.broadcast %cst_5 : f32 to vector<8x128xf32>
    %9 = arith.subf %5, %8 : vector<8x128xf32>
    %10 = arith.cmpf one, %9, %9 : vector<8x128xf32>
    %11 = vector.broadcast %cst_5 : f32 to vector<8x128xf32>
    %12 = arith.addf %5, %11 : vector<8x128xf32>
    %13 = math.absf %9 : vector<8x128xf32>
    %cst_6 = arith.constant 0.000000e+00 : f32
    %14 = vector.broadcast %cst_6 : f32 to vector<8x128xf32>
    %15 = arith.subf %14, %13 : vector<8x128xf32>
    %16 = math.exp %15 : vector<8x128xf32>
    %17 = math.log1p %16 : vector<8x128xf32>
    %18 = arith.addf %7, %17 : vector<8x128xf32>
    %19 = arith.select %10, %12, %18 : vector<8x128xi1>, vector<8x128xf32>
    %20 = arith.negf %5 : vector<8x128xf32>
    %21 = math.exp %20 : vector<8x128xf32>
    %cst_7 = arith.constant 1.000000e+00 : f32
    %22 = vector.broadcast %cst_7 : f32 to vector<8x128xf32>
    %23 = arith.addf %22, %21 : vector<8x128xf32>
    %24 = arith.divf %22, %23 : vector<8x128xf32>
    %25 = tpu.iota {dimensions = array<i32: 1>} : vector<8x128xi32>
    %c8_i32 = arith.constant 8 : i32
    %26 = vector.broadcast %c8_i32 : i32 to vector<8x128xi32>
    %27 = arith.cmpi slt, %25, %26 : vector<8x128xi32>
    %28 = arith.extui %27 : vector<8x128xi1> to vector<8x128xi32>
    %29 = arith.sitofp %28 : vector<8x128xi32> to vector<8x128xf32>
    %30 = arith.mulf %5, %24 : vector<8x128xf32>
    %31 = arith.subf %19, %30 : vector<8x128xf32>
    %32 = arith.mulf %31, %29 : vector<8x128xf32>
    %c0_8 = arith.constant 0 : index
    %c0_9 = arith.constant 0 : index
    %33 = vector.load %arg4[%c0_8, %c0_9] : memref<8x128xf32, #tpu.memory_space<vmem>>, vector<8x128xf32>
    %34 = arith.mulf %33, %5 : vector<8x128xf32>
    %35 = arith.subf %34, %19 : vector<8x128xf32>
    %36 = arith.mulf %35, %29 : vector<8x128xf32>
    %c0_10 = arith.constant 0 : index
    %c0_11 = arith.constant 0 : index
    %37 = vector.load %arg5[%c0_10, %c0_11] : memref<8x128xf32, #tpu.memory_space<vmem>>, vector<8x128xf32>
    tpu.vector_store %arg5[%c0_10, %c0_11], %5 {strides = array<i32>} : memref<8x128xf32, #tpu.memory_space<vmem>>, vector<8x128xf32>,
    %cst_12 = arith.constant 0.000000e+00 : f32
    %38 = vector.broadcast %cst_12 : f32 to vector<8x128xf32>
    %39 = arith.cmpf ogt, %5, %38 : vector<8x128xf32>
    %40 = arith.extui %39 : vector<8x128xi1> to vector<8x128xi32>
    %41 = arith.sitofp %40 : vector<8x128xi32> to vector<8x128xf32>
    %c0_13 = arith.constant 0 : index
    %c0_14 = arith.constant 0 : index
    %42 = vector.load %arg6[%c0_13, %c0_14] : memref<8x128xf32, #tpu.memory_space<vmem>>, vector<8x128xf32>
    tpu.vector_store %arg6[%c0_13, %c0_14], %41 {strides = array<i32>} : memref<8x128xf32, #tpu.memory_space<vmem>>, vector<8x128xf32>,
    %cst_15 = arith.constant dense<0.000000e+00> : vector<8xf32>
    %43 = vector.multi_reduction <add>, %32, %cst_15 [1] : vector<8x128xf32> to vector<8xf32>
    %44 = vector.shape_cast %43 : vector<8xf32> to vector<8x1xf32>
    %cst_16 = arith.constant dense<0.000000e+00> : vector<8xf32>
    %45 = vector.multi_reduction <add>, %36, %cst_16 [1] : vector<8x128xf32> to vector<8xf32>
    %46 = vector.shape_cast %45 : vector<8xf32> to vector<8x1xf32>
    %47 = tpu.iota {dimensions = array<i32: 1>} : vector<8x128xi32>
    %c0_i32 = arith.constant 0 : i32
    %48 = vector.broadcast %c0_i32 : i32 to vector<8x128xi32>
    %49 = arith.cmpi eq, %47, %48 : vector<8x128xi32>
    %c1_i32 = arith.constant 1 : i32
    %50 = vector.broadcast %c1_i32 : i32 to vector<8x128xi32>
    %51 = arith.cmpi eq, %47, %50 : vector<8x128xi32>
    %cst_17 = arith.constant 0.000000e+00 : f32
    %52 = vector.shape_cast %46 : vector<8x1xf32> to vector<8x1xf32>
    %53 = vector.broadcast %52 : vector<8x1xf32> to vector<8x128xf32>
    %54 = vector.broadcast %cst_17 : f32 to vector<8x128xf32>
    %55 = arith.select %51, %53, %54 : vector<8x128xi1>, vector<8x128xf32>
    %56 = vector.shape_cast %44 : vector<8x1xf32> to vector<8x1xf32>
    %57 = vector.broadcast %56 : vector<8x1xf32> to vector<8x128xf32>
    %58 = arith.select %49, %57, %55 : vector<8x128xi1>, vector<8x128xf32>
    %c0_18 = arith.constant 0 : index
    %c0_19 = arith.constant 0 : index
    %59 = vector.load %arg7[%c0_18, %c0_19] : memref<8x128xf32, #tpu.memory_space<vmem>>, vector<8x128xf32>
    tpu.vector_store %arg7[%c0_18, %c0_19], %58 {strides = array<i32>} : memref<8x128xf32, #tpu.memory_space<vmem>>, vector<8x128xf32>,
    return
  }
  func.func @transform_0(%arg0: i32) -> (i32, i32) {
    %c0_i32 = arith.constant 0 : i32
    %c0_i32_0 = arith.constant 0 : i32
    return %arg0, %c0_i32 : i32, i32
  }
  func.func @transform_1(%arg0: i32) -> (i32, i32) {
    %c0_i32 = arith.constant 0 : i32
    %c0_i32_0 = arith.constant 0 : i32
    %c0_i32_1 = arith.constant 0 : i32
    return %c0_i32, %c0_i32_0 : i32, i32
  }
  func.func @transform_2(%arg0: i32) -> (i32, i32) {
    %c0_i32 = arith.constant 0 : i32
    %c0_i32_0 = arith.constant 0 : i32
    %c0_i32_1 = arith.constant 0 : i32
    return %c0_i32, %c0_i32_0 : i32, i32
  }
  func.func @transform_3(%arg0: i32) -> (i32, i32) {
    %c0_i32 = arith.constant 0 : i32
    %c0_i32_0 = arith.constant 0 : i32
    return %arg0, %c0_i32 : i32, i32
  }
  func.func @transform_4(%arg0: i32) -> (i32, i32) {
    %c0_i32 = arith.constant 0 : i32
    %c0_i32_0 = arith.constant 0 : i32
    return %arg0, %c0_i32 : i32, i32
  }
  func.func @transform_5(%arg0: i32) -> (i32, i32) {
    %c0_i32 = arith.constant 0 : i32
    %c0_i32_0 = arith.constant 0 : i32
    return %arg0, %c0_i32 : i32, i32
  }
  func.func @transform_6(%arg0: i32) -> (i32, i32) {
    %c0_i32 = arith.constant 0 : i32
    %c0_i32_0 = arith.constant 0 : i32
    return %arg0, %c0_i32 : i32, i32
  }
}

</mosaic_0001>

<llo_original>
// kernel: tpu_custom_call.1
$region0: #{tpu_custom_call.1}
  #allocation0 [shape = 'u32[]', space=smem, size = 0x4, offset = 0x4, fixed_abs, tag = 'smem constant byte address 0x4 - core index']
  #allocation1 [shape = 'u32[144,128]{1,0:T(1,128)}', space=vmem, size = 0x12000, scoped, tag = 'internal scratch']
  %s0 = inlined_call_operand.hbm [shape: f32[8,32], index: 0, kind: input, shape index: {}]
  %s1 = inlined_call_operand.hbm [shape: f32[32,128], index: 1, kind: input, shape index: {}]
  %s2 = inlined_call_operand.vmem [shape: f32[1,128], index: 2, kind: input, shape index: {}]
  %s3 = inlined_call_operand.vmem [shape: f32[8,128], index: 3, kind: input, shape index: {}]
  %s4 = inlined_call_operand.hbm [shape: f32[8,128], index: 4, kind: output, shape index: {0}]
  %s5 = inlined_call_operand.hbm [shape: f32[8,128], index: 5, kind: output, shape index: {1}]
  %s6 = inlined_call_operand.hbm [shape: f32[8,128], index: 6, kind: output, shape index: {2}]
  %7 = xla_tuple %s4, %s5, %s6
  %s8 = sld [smem:[#allocation0]]
  $region50: #{tpu_custom_call.1} parent=0
    _
  %s10 = ssub.s32 1, %s8
  %s11 = scalar_select 0, %s10, %s8
  $region1: #{tpu_custom_call.1} parent=0
    #allocation2 [shape = 'u8[4096]{0}', space=vmem, size = 0x1000, scoped, tag = 'input window, operand 0, single buffered']
    #allocation3 [shape = 's32[1]{0}', space=sflag, size = 0x4, scoped, tag = 'scoped memory for tpu_custom_call.1']
    #allocation4 [shape = 's32[1]{0}', space=sflag, size = 0x4, scoped, tag = 'scoped memory for tpu_custom_call.1']
    #allocation5 [shape = 'u8[16384]{0}', space=vmem, size = 0x4000, scoped, tag = 'input window, operand 1, single buffered']
    #allocation6 [shape = 's32[1]{0}', space=sflag, size = 0x4, scoped, tag = 'scoped memory for tpu_custom_call.1']
    #allocation7 [shape = 'u8[4096]{0}', space=vmem, size = 0x1000, scoped, tag = 'output window, operand 0, single buffered']
    #allocation8 [shape = 'u8[4096]{0}', space=vmem, size = 0x1000, scoped, tag = 'output window, operand 1, single buffered']
    #allocation9 [shape = 's32[1]{0}', space=sflag, size = 0x4, scoped, tag = 'scoped memory for tpu_custom_call.1']
    #allocation10 [shape = 'u8[4096]{0}', space=vmem, size = 0x1000, scoped, tag = 'output window, operand 2, single buffered']
    %12 = vsyncpa [#allocation3], 0
    %13 = vsyncpa [#allocation6], 0
    %14 = vsyncpa [#allocation4], 0
    %15 = vsyncpa [#allocation9], 0
    // Predicated region
    $region2: #{tpu_custom_call.1} parent=1 // pred_check
      _
    $region3: #{tpu_custom_call.1} parent=1 // pred_check_branch
      %17 = sbr.rel (0) target = $region5
    $region4: #{tpu_custom_call.1} parent=1 // pred_region
      %s19 = ssub.s32 128, 128
      %20 = vsyncadd [#allocation3], %s19
      %s22 = sshll.u32 [#allocation2], 4
      %s23 = int_to_ptr.vmem [resolvable:$true] %s22
      %25 = dma.hbm_to_vmem [thread:$0]  %s0, 128, %s23, [#allocation3]
    $region5: #{tpu_custom_call.1} parent=1 // pred_fallthru
      _
    // Predicated region
    $region6: #{tpu_custom_call.1} parent=1 // pred_check
      _
    $region7: #{tpu_custom_call.1} parent=1 // pred_check_branch
      %27 = sbr.rel (0) target = $region9
    $region8: #{tpu_custom_call.1} parent=1 // pred_region
      %s29 = ssub.s32 512, 512
      %30 = vsyncadd [#allocation6], %s29
      %s31 = sshll.u32 [#allocation5], 4
      %s32 = int_to_ptr.vmem [resolvable:$true] %s31
      %37 = dma.hbm_to_vmem [thread:$0]  %s1, 512, %s32, [#allocation6], 128, 128, 8
    $region9: #{tpu_custom_call.1} parent=1 // pred_fallthru
      _
    // Predicated region
    $region10: #{tpu_custom_call.1} parent=1 // pred_check
      _
    $region11: #{tpu_custom_call.1} parent=1 // pred_check_branch
      %39 = sbr.rel (0) target = $region13
    $region12: #{tpu_custom_call.1} parent=1 // pred_region
      _
    $region13: #{tpu_custom_call.1} parent=1 // pred_fallthru
      _
    // Predicated region
    $region14: #{tpu_custom_call.1} parent=1 // pred_check
      _
    $region15: #{tpu_custom_call.1} parent=1 // pred_check_branch
      %41 = sbr.rel (0) target = $region17
    $region16: #{tpu_custom_call.1} parent=1 // pred_region
      _
    $region17: #{tpu_custom_call.1} parent=1 // pred_fallthru
      _
    // Predicated region
    $region18: #{tpu_custom_call.1} parent=1 // pred_check
      _
    $region19: #{tpu_custom_call.1} parent=1 // pred_check_branch
      %43 = sbr.rel (0) target = $region21
    $region20: #{tpu_custom_call.1} parent=1 // pred_region
      %44 = dma.done [#allocation3], 128
    $region21: #{tpu_custom_call.1} parent=1 // pred_fallthru
      _
    // Predicated region
    $region22: #{tpu_custom_call.1} parent=1 // pred_check
      _
    $region23: #{tpu_custom_call.1} parent=1 // pred_check_branch
      %46 = sbr.rel (0) target = $region25
    $region24: #{tpu_custom_call.1} parent=1 // pred_region
      %47 = dma.done [#allocation6], 512
    $region25: #{tpu_custom_call.1} parent=1 // pred_fallthru
      _
    %v48 = vld [vmem:[#allocation2] sm:$0xff]
    %v49 = vld [vmem:[#allocation5] sm:$0xff]
    %v50 = vld [vmem:[#allocation5 + $0x8] sm:$0xff]
    %v51 = vld [vmem:[#allocation5 + $0x10] sm:$0xff]
    %v52 = vld [vmem:[#allocation5 + $0x18] sm:$0xff]
    %v53 = vld [vmem:[%s2] sm:$0x1]
    %v55 = vlaneseq
    %v56 = vshrl.u32 %v55, 7
    %v57 = vsub.s32 0, %v56
    %v58 = vrot.slane %v53, %v57
    %vm60 = vcmask 261120
    %v62 = vsel %vm60, %v48, 0
    %64 = vmatprep.subr.mxu0 0.0
    %65 = vmatpush1.msra.mxu0 %v49
    %66 = vmatprep.subr.mxu0 0.0
    %67 = vmatpush1.msra.mxu0 %v50
    %68 = vmatprep.subr.mxu0 0.0
    %69 = vmatpush1.msra.mxu0 %v51
    %70 = vmatprep.subr.mxu0 0.0
    %71 = vmatpush1.msra.mxu0 %v52
    %72 = vmatprep.subr.mxu0 0.0
    %73 = vmatpush1.msra.mxu0 0.0
    %74 = vmatprep.subr.mxu0 0.0
    %75 = vmatpush1.msra.mxu0 0.0
    %76 = vmatprep.subr.mxu0 0.0
    %77 = vmatpush1.msra.mxu0 0.0
    %78 = vmatprep.subr.mxu0 0.0
    %79 = vmatpush1.msra.mxu0 0.0
    %80 = vmatprep.subr.mxu0 0.0
    %81 = vmatpush1.msra.mxu0 0.0
    %82 = vmatprep.subr.mxu0 0.0
    %83 = vmatpush1.msra.mxu0 0.0
    %84 = vmatprep.subr.mxu0 0.0
    %85 = vmatpush1.msra.mxu0 0.0
    %86 = vmatprep.subr.mxu0 0.0
    %87 = vmatpush1.msra.mxu0 0.0
    %88 = vmatprep.subr.mxu0 0.0
    %89 = vmatpush1.msra.mxu0 0.0
    %90 = vmatprep.subr.mxu0 0.0
    %91 = vmatpush1.msra.mxu0 0.0
    %92 = vmatprep.subr.mxu0 0.0
    %93 = vmatpush1.msra.mxu0 0.0
    %94 = vmatprep.subr.mxu0 0.0
    %95 = vmatpush1.msra.mxu0 0.0
    %96 = vmatprep.subr.mxu0 0.0
    %97 = vmatpush1.msra.mxu0 0.0
    %98 = vmatprep.subr.mxu0 0.0
    %99 = vmatpush1.msra.mxu0 0.0
    %100 = vmatprep.subr.mxu0 0.0
    %101 = vmatpush1.msra.mxu0 0.0
    %102 = vmatprep.subr.mxu0 0.0
    %103 = vmatpush1.msra.mxu0 0.0
    %104 = vmatprep.subr.mxu0 0.0
    %105 = vmatpush1.msra.mxu0 0.0
    %106 = vmatprep.subr.mxu0 0.0
    %107 = vmatpush1.msra.mxu0 0.0
    %108 = vmatprep.subr.mxu0 0.0
    %109 = vmatpush1.msra.mxu0 0.0
    %110 = vmatprep.subr.mxu0 0.0
    %111 = vmatpush1.msra.mxu0 0.0
    %112 = vmatprep.subr.mxu0 0.0
    %113 = vmatpush1.msra.mxu0 0.0
    %114 = vmatprep.subr.mxu0 0.0
    %115 = vmatpush1.msra.mxu0 0.0
    %116 = vmatprep.subr.mxu0 0.0
    %117 = vmatpush1.msra.mxu0 0.0
    %118 = vmatprep.subr.mxu0 0.0
    %119 = vmatpush1.msra.mxu0 0.0
    %120 = vmatprep.subr.mxu0 0.0
    %121 = vmatpush1.msra.mxu0 0.0
    %122 = vmatprep.subr.mxu0 0.0
    %123 = vmatpush1.msra.mxu0 0.0
    %124 = vmatprep.subr.mxu0 0.0
    %125 = vmatpush1.msra.mxu0 0.0
    %126 = vmatprep.subr.mxu0 0.0
    %127 = vmatpush1.msra.mxu0 0.0
    %128 = vmatprep.mubr.f32.mxu0 0.0
    %129 = vmatmul.mubr.f32.gmra.mrb[0].mxu0 %v62
    %v130 = vpop.f32.mrb[0].mxu0
    %v131 = vadd.f32 %v58, %v130
    %v132 = vpop.f32.mrb[0].mxu0
    %133 = vdwg.mxu0
    %v134 = vmax.f32 %v131, 0.0
    %vm135 = vcmp.ne.f32.partialorder %v131, %v131
    %v136 = vadd.f32 %v131, 0.0
    %v137 = vand.u32 2147483647, %v131
    %v138 = vsub.f32 0.0, %v137
    %v139 = vmul.f32 %v138, 1.442695
    %v140 = vpow.pop %v139
    %v141 = vadd.f32 %v140, 1.0
    %v142 = vlog2.pop %v141
    %v143 = vmul.f32 %v142, 0.6931472
    %v144 = vmul.f32 -0.5, %v140
    %v145 = vadd.f32 %v144, 1.0
    %v146 = vmul.f32 %v145, %v140
    %v147 = vand.u32 2147483647, %v140
    %vm148 = vcmp.lt.f32.partialorder %v147, 0.0004427343
    %v149 = vsel %vm148, %v146, %v143
    %v150 = vadd.f32 %v134, %v149
    %v151 = vsel %vm135, %v136, %v150
    %v152 = vxor.u32 %v131, 2147483648
    %v153 = vmul.f32 %v152, 1.442695
    %v154 = vpow.pop %v153
    %v155 = vadd.f32 %v154, 1.0
    %v156 = vrcp.pop %v155
    %v157 = vmul.f32 1.0, %v156
    %v158 = vlaneseq
    %v159 = vand.u32 %v158, 127
    %vm160 = vcmp.lt.s32.totalorder %v159, 8
    %v161 = vsel %vm160, 1, 0
    %v162 = vcvt.s32.f32 %v161
    %v163 = vmul.f32 %v131, %v157
    %v164 = vsub.f32 %v151, %v163
    %v165 = vmul.f32 %v164, %v162
    %v166 = vld [vmem:[%s3] sm:$0xff]
    %v167 = vmul.f32 %v166, %v131
    %v168 = vsub.f32 %v167, %v151
    %v169 = vmul.f32 %v168, %v162
    %170 = vst [vmem:[#allocation7] sm:$0xff] %v131
    %vm171 = vcmp.gt.f32.partialorder %v131, 0.0
    %v172 = vsel %vm171, 1, 0
    %v173 = vcvt.s32.f32 %v172
    %174 = vst [vmem:[#allocation8] sm:$0xff] %v173
    %175 = vadd.xlane.f32.xlu0 %v165
    %v176 = vpop.xlane.xlu0 %175
    %177 = vadd.xlane.f32.xlu0 %v169
    %v178 = vpop.xlane.xlu0 %177
    %vm179 = vcmp.eq.s32.totalorder %v159, 0
    %vm180 = vcmp.eq.s32.totalorder %v159, 1
    %v181 = vsel %vm180, %v178, 0.0
    %v182 = vsel %vm179, %v176, %v181
    %183 = vst [vmem:[#allocation10] sm:$0xff] %v182
    // Predicated region
    $region26: #{tpu_custom_call.1} parent=1 // pred_check
      _
    $region27: #{tpu_custom_call.1} parent=1 // pred_check_branch
      %185 = sbr.rel (0) target = $region29
    $region28: #{tpu_custom_call.1} parent=1 // pred_region
      %s187 = ssub.s32 128, 128
      %188 = vsyncadd [#allocation4], %s187
      %s190 = sshll.u32 [#allocation7], 4
      %s191 = int_to_ptr.vmem [resolvable:$true] %s190
      %193 = dma.vmem_to_hbm [thread:$0]  %s191, 128, %s4, [#allocation4]
    $region29: #{tpu_custom_call.1} parent=1 // pred_fallthru
      _
    // Predicated region
    $region30: #{tpu_custom_call.1} parent=1 // pred_check
      _
    $region31: #{tpu_custom_call.1} parent=1 // pred_check_branch
      %195 = sbr.rel (0) target = $region33
    $region32: #{tpu_custom_call.1} parent=1 // pred_region
      %s197 = ssub.s32 128, 128
      %198 = vsyncadd [#allocation9], %s197
      %s200 = sshll.u32 [#allocation8], 4
      %s201 = int_to_ptr.vmem [resolvable:$true] %s200
      %203 = dma.vmem_to_hbm [thread:$0]  %s201, 128, %s5, [#allocation9]
    $region33: #{tpu_custom_call.1} parent=1 // pred_fallthru
      _
    // Predicated region
    $region34: #{tpu_custom_call.1} parent=1 // pred_check
      _
    $region35: #{tpu_custom_call.1} parent=1 // pred_check_branch
      %205 = sbr.rel (0) target = $region37
    $region36: #{tpu_custom_call.1} parent=1 // pred_region
      %s207 = ssub.s32 128, 128
      %208 = vsyncadd [#allocation9], %s207
      %s210 = sshll.u32 [#allocation10], 4
      %s211 = int_to_ptr.vmem [resolvable:$true] %s210
      %213 = dma.vmem_to_hbm [thread:$0]  %s211, 128, %s6, [#allocation9]
    $region37: #{tpu_custom_call.1} parent=1 // pred_fallthru
      _
    // Predicated region
    $region38: #{tpu_custom_call.1} parent=1 // pred_check
      _
    $region39: #{tpu_custom_call.1} parent=1 // pred_check_branch
      %215 = sbr.rel (0) target = $region41
    $region40: #{tpu_custom_call.1} parent=1 // pred_region
      %216 = dma.done [#allocation4], 128
    $region41: #{tpu_custom_call.1} parent=1 // pred_fallthru
      _
    // Predicated region
    $region42: #{tpu_custom_call.1} parent=1 // pred_check
      _
    $region43: #{tpu_custom_call.1} parent=1 // pred_check_branch
      %218 = sbr.rel (0) target = $region45
    $region44: #{tpu_custom_call.1} parent=1 // pred_region
      %219 = dma.done [#allocation9], 128
    $region45: #{tpu_custom_call.1} parent=1 // pred_fallthru
      _
    // Predicated region
    $region46: #{tpu_custom_call.1} parent=1 // pred_check
      _
    $region47: #{tpu_custom_call.1} parent=1 // pred_check_branch
      %221 = sbr.rel (0) target = $region49
    $region48: #{tpu_custom_call.1} parent=1 // pred_region
      %222 = dma.done [#allocation9], 128
    $region49: #{tpu_custom_call.1} parent=1 // pred_fallthru
      _
    %223 = vsyncpa [#allocation3], 1
    %224 = vsyncpa [#allocation6], 1
    %225 = vsyncpa [#allocation4], 1
    %226 = vsyncpa [#allocation9], 1

</llo_original>
